<compile_context>
chip_gen: v7x
topology: tpu7x:2x2x1
jax: 0.10.0
libtpu: 0.0.40
codegen_flags: <defaults>
</compile_context>

<pallas_src>
import functools

import jax
import jax.numpy as jnp
from jax.experimental import pallas as pl
from jax.experimental.pallas import tpu as pltpu

N_STATES = 31
N_ACTIONS = 4


def _round_up(x, m):
    return (x + m - 1) // m * m


def ffnn_kernel(x_ref, w1_ref, b1_ref, w2_ref, b2_ref, o_ref):
    # Layer 1: in-kernel f32 -> bf16 cast (VPU has slack), MXU matmul, f32 accumulate.
    x_bf = x_ref[...].astype(jnp.bfloat16)
    w1_bf = w1_ref[...].astype(jnp.bfloat16)
    h = jnp.dot(x_bf, w1_bf, preferred_element_type=jnp.float32)
    h = jax.nn.sigmoid(h + b1_ref[...])          # f32 bias add (VPU) + sigmoid (EUP)
    # Layer 2: tiny resident f32 weights, f32 accumulation.
    out = jnp.dot(h, w2_ref[...], preferred_element_type=jnp.float32)
    # Last dim = 4 (< 128 lanes) -> masked store; HBM writeback region is contiguous.
    o_ref[...] = (out + b2_ref[...]).astype(o_ref.dtype)


@functools.partial(jax.jit, static_argnames=("block_b",))
def _ffnn_pallas(x, w1, b1, w2, b2, *, block_b):
    B, n_in = x.shape
    H = w1.shape[1]
    n_out = w2.shape[1]
    grid_b = pl.cdiv(B, block_b)   # partial final block handled by Pallas masking

    # VMEM budget: lane-padded (128-lane) tiles, double-buffered in/out, plus the
    # f32 activations and the bf16 cast temporary, plus slack for Mosaic scratch.
    x_tile = block_b * 128 * 4     # f32 x tile (31 lanes padded to 128)
    o_tile = block_b * 128 * 4     # f32 out tile (4 lanes padded to 128)
    h_tmp = block_b * 128 * 4      # f32 activation intermediate (H lanes padded)
    xbf_tmp = block_b * 128 * 2    # bf16 cast of the x tile
    vmem = 2 * (x_tile + o_tile) + h_tmp + xbf_tmp + (8 << 20)
    vmem = max(16 << 20, min(vmem, 48 << 20))   # keep headroom below v7x 64 MiB

    return pl.pallas_call(
        ffnn_kernel,
        out_shape=jax.ShapeDtypeStruct((B, n_out), jnp.float32),
        grid_spec=pltpu.PrefetchScalarGridSpec(
            num_scalar_prefetch=0,
            grid=(grid_b,),
            in_specs=[
                pl.BlockSpec((block_b, n_in), lambda i: (i, 0)),   # x tile (streamed, f32)
                pl.BlockSpec((n_in, H), lambda i: (0, 0)),         # w1 (resident)
                pl.BlockSpec((1, H), lambda i: (0, 0)),            # b1
                pl.BlockSpec((H, n_out), lambda i: (0, 0)),        # w2
                pl.BlockSpec((1, n_out), lambda i: (0, 0)),        # b2
            ],
            out_specs=pl.BlockSpec((block_b, n_out), lambda i: (i, 0)),
        ),
        compiler_params=pltpu.CompilerParams(
            dimension_semantics=("parallel",),   # shards grid steps across v7x cores
            vmem_limit_bytes=int(vmem),
        ),
    )(x, w1, b1, w2, b2)


@jax.jit
def _ffnn_ref_f32(x, w1, b1, w2, b2):
    """Exact-f32 PyTorch-semantics reference."""
    hp = jax.lax.Precision.HIGHEST
    h = jax.nn.sigmoid(jnp.dot(x, w1, precision=hp) + b1)
    return jnp.dot(h, w2, precision=hp) + b2


@jax.jit
def _ffnn_ref_bf16in(x, w1, b1, w2, b2):
    """Kernel-matched reference: layer-1 operands quantized to bf16, f32 accumulate."""
    xb = x.astype(jnp.bfloat16).astype(jnp.float32)
    w1b = w1.astype(jnp.bfloat16).astype(jnp.float32)
    h = jax.nn.sigmoid(jnp.dot(xb, w1b) + b1)
    return jnp.dot(h, w2) + b2


def ffnn_forward(x, w1, b1, w2, b2, *, block_b=1024, min_pallas_batch=256):
    """Fused FFNN forward.  x: (B, 31) f32 -> (B, 4) f32.

    Layer-1 inputs are taken in bf16 (f32 accumulation) on every path, so numerics
    do not change with batch size (consistency across the fallback boundary).
    """
    B = x.shape[0]

    # Tiny batches: Pallas launch + pipeline prologue exceed the total compute.
    if B < min_pallas_batch:
        return _ffnn_ref_bf16in(x, w1, b1, w2, b2)

    # Tile choice: >= 8 grid steps when possible (>= 4 per v7x TensorCore, keeps the
    # double-buffer overlapped), tiles in [256, block_b] rows, multiples of 128.
    blk = min(_round_up(min(block_b, 4096), 128),
              max(256, _round_up(pl.cdiv(B, 8), 128)))
    return _ffnn_pallas(x, w1, b1, w2, b2, block_b=blk)


def init_params(key, hidden_dimension):
    """Deterministic init mimicking nn.Linear's U(-1/sqrt(fan_in), 1/sqrt(fan_in))."""
    k1, k2, k3, k4 = jax.random.split(key, 4)
    bound1 = 1.0 / jnp.sqrt(N_STATES)
    bound2 = 1.0 / jnp.sqrt(hidden_dimension)
    w1 = jax.random.uniform(k1, (N_STATES, hidden_dimension), jnp.float32, -bound1, bound1)
    b1 = jax.random.uniform(k2, (1, hidden_dimension), jnp.float32, -bound1, bound1)
    w2 = jax.random.uniform(k3, (hidden_dimension, N_ACTIONS), jnp.float32, -bound2, bound2)
    b2 = jax.random.uniform(k4, (1, N_ACTIONS), jnp.float32, -bound2, bound2)
    return w1, b1, w2, b2


if __name__ == "__main__":
    key = jax.random.PRNGKey(0)
    k_x1, k_x2, k_x3, k_p = jax.random.split(key, 4)

    hidden_dimension = 32
    w1, b1, w2, b2 = init_params(k_p, hidden_dimension)

    # --- 1) Pallas path: 8 grid steps of 256-row tiles, no wrapper-side copies.
    B1 = 2048
    x1 = jax.random.normal(k_x1, (B1, N_STATES), jnp.float32)
    out1 = jax.block_until_ready(ffnn_forward(x1, w1, b1, w2, b2))
    assert out1.shape == (B1, N_ACTIONS)
    ref1_q = _ffnn_ref_bf16in(x1, w1, b1, w2, b2)   # kernel-matched numerics (tight)
    assert bool(jnp.allclose(out1, ref1_q, atol=5e-3, rtol=5e-3)), \
        float(jnp.max(jnp.abs(out1 - ref1_q)))
    ref1_f = _ffnn_ref_f32(x1, w1, b1, w2, b2)      # exact PyTorch semantics (loose)
    assert bool(jnp.allclose(out1, ref1_f, atol=5e-2, rtol=5e-2))

    # --- 2) Ragged batch: partial final block handled in-kernel (no jnp.pad copy).
    B2 = 1000
    x2 = jax.random.normal(k_x2, (B2, N_STATES), jnp.float32)
    out2 = jax.block_until_ready(ffnn_forward(x2, w1, b1, w2, b2))
    assert out2.shape == (B2, N_ACTIONS)
    ref2_q = _ffnn_ref_bf16in(x2, w1, b1, w2, b2)
    assert bool(jnp.allclose(out2, ref2_q, atol=5e-3, rtol=5e-3)), \
        float(jnp.max(jnp.abs(out2 - ref2_q)))
    assert bool(jnp.isfinite(out2).all())

    # --- 3) Tiny batch: plain-JAX fallback with the same (bf16 layer-1) numerics.
    B3 = 8
    x3 = jax.random.normal(k_x3, (B3, N_STATES), jnp.float32)
    out3 = jax.block_until_ready(ffnn_forward(x3, w1, b1, w2, b2))
    assert out3.shape == (B3, N_ACTIONS)
    assert bool(jnp.allclose(out3, _ffnn_ref_f32(x3, w1, b1, w2, b2), atol=5e-2, rtol=5e-2))

    print("KERNEL_OK")
</pallas_src>

<mosaic_0001>
module attributes {stable_mosaic.version = 11 : i64} {
  func.func @ffnn_kernel(%arg0: i32, %arg1: memref<256x31xf32, #tpu.memory_space<vmem>>, %arg2: memref<31x32xf32, #tpu.memory_space<vmem>>, %arg3: memref<1x32xf32, #tpu.memory_space<vmem>>, %arg4: memref<32x4xf32, #tpu.memory_space<vmem>>, %arg5: memref<1x4xf32, #tpu.memory_space<vmem>>, %arg6: memref<256x4xf32, #tpu.memory_space<vmem>>) attributes {dimension_semantics = [#tpu.dimension_semantics<parallel>], iteration_bounds = array<i64: 8>, scalar_prefetch = 0 : i64, scratch_operands = 0 : i64, tpu.core_type = #tpu.core_type<tc>, window_params = [{transform_indices = @transform_0, window_bounds = array<i64: 256, 31>}, {pipeline_mode = #tpu.pipeline_mode<synchronous>, transform_indices = @transform_1, window_bounds = array<i64: 31, 32>}, {pipeline_mode = #tpu.pipeline_mode<synchronous>, transform_indices = @transform_2, window_bounds = array<i64: 1, 32>}, {pipeline_mode = #tpu.pipeline_mode<synchronous>, transform_indices = @transform_3, window_bounds = array<i64: 32, 4>}, {pipeline_mode = #tpu.pipeline_mode<synchronous>, transform_indices = @transform_4, window_bounds = array<i64: 1, 4>}, {transform_indices = @transform_5, window_bounds = array<i64: 256, 4>}]} {
    %c0 = arith.constant 0 : index
    %c0_0 = arith.constant 0 : index
    %0 = vector.load %arg1[%c0, %c0_0] : memref<256x31xf32, #tpu.memory_space<vmem>>, vector<256x31xf32>
    %1 = arith.truncf %0 : vector<256x31xf32> to vector<256x31xbf16>
    %c0_1 = arith.constant 0 : index
    %c0_2 = arith.constant 0 : index
    %2 = vector.load %arg2[%c0_1, %c0_2] : memref<31x32xf32, #tpu.memory_space<vmem>>, vector<31x32xf32>
    %3 = arith.truncf %2 : vector<31x32xf32> to vector<31x32xbf16>
    %cst = arith.constant dense<0.000000e+00> : vector<256x32xf32>
    %4 = tpu.matmul %1, %3, %cst {dimension_numbers = #tpu.dot_dimension_numbers<[1], [0], [0], [1], [0, 0, 1, 1], [], []>} : vector<256x31xbf16>, vector<31x32xbf16>, vector<256x32xf32> -> vector<256x32xf32>
    %c0_3 = arith.constant 0 : index
    %c0_4 = arith.constant 0 : index
    %5 = vector.load %arg3[%c0_3, %c0_4] : memref<1x32xf32, #tpu.memory_space<vmem>>, vector<1x32xf32>
    %6 = vector.broadcast %5 : vector<1x32xf32> to vector<256x32xf32>
    %7 = arith.addf %4, %6 : vector<256x32xf32>
    %8 = arith.negf %7 : vector<256x32xf32>
    %9 = math.exp %8 : vector<256x32xf32>
    %cst_5 = arith.constant 1.000000e+00 : f32
    %10 = vector.broadcast %cst_5 : f32 to vector<256x32xf32>
    %11 = arith.addf %10, %9 : vector<256x32xf32>
    %12 = arith.divf %10, %11 : vector<256x32xf32>
    %c0_6 = arith.constant 0 : index
    %c0_7 = arith.constant 0 : index
    %13 = vector.load %arg4[%c0_6, %c0_7] : memref<32x4xf32, #tpu.memory_space<vmem>>, vector<32x4xf32>
    %cst_8 = arith.constant dense<0.000000e+00> : vector<256x4xf32>
    %14 = tpu.matmul %12, %13, %cst_8 {dimension_numbers = #tpu.dot_dimension_numbers<[1], [0], [0], [1], [0, 0, 1, 1], [], []>} : vector<256x32xf32>, vector<32x4xf32>, vector<256x4xf32> -> vector<256x4xf32>
    %c0_9 = arith.constant 0 : index
    %c0_10 = arith.constant 0 : index
    %15 = vector.load %arg5[%c0_9, %c0_10] : memref<1x4xf32, #tpu.memory_space<vmem>>, vector<1x4xf32>
    %16 = vector.broadcast %15 : vector<1x4xf32> to vector<256x4xf32>
    %17 = arith.addf %14, %16 : vector<256x4xf32>
    %c0_11 = arith.constant 0 : index
    %c0_12 = arith.constant 0 : index
    %18 = vector.load %arg6[%c0_11, %c0_12] : memref<256x4xf32, #tpu.memory_space<vmem>>, vector<256x4xf32>
    tpu.vector_store %arg6[%c0_11, %c0_12], %17 {strides = array<i32>} : memref<256x4xf32, #tpu.memory_space<vmem>>, vector<256x4xf32>,
    return
  }
  func.func @transform_0(%arg0: i32) -> (i32, i32) {
    %c0_i32 = arith.constant 0 : i32
    %c0_i32_0 = arith.constant 0 : i32
    return %arg0, %c0_i32 : i32, i32
  }
  func.func @transform_1(%arg0: i32) -> (i32, i32) {
    %c0_i32 = arith.constant 0 : i32
    %c0_i32_0 = arith.constant 0 : i32
    %c0_i32_1 = arith.constant 0 : i32
    return %c0_i32, %c0_i32_0 : i32, i32
  }
  func.func @transform_2(%arg0: i32) -> (i32, i32) {
    %c0_i32 = arith.constant 0 : i32
    %c0_i32_0 = arith.constant 0 : i32
    %c0_i32_1 = arith.constant 0 : i32
    return %c0_i32, %c0_i32_0 : i32, i32
  }
  func.func @transform_3(%arg0: i32) -> (i32, i32) {
    %c0_i32 = arith.constant 0 : i32
    %c0_i32_0 = arith.constant 0 : i32
    %c0_i32_1 = arith.constant 0 : i32
    return %c0_i32, %c0_i32_0 : i32, i32
  }
  func.func @transform_4(%arg0: i32) -> (i32, i32) {
    %c0_i32 = arith.constant 0 : i32
    %c0_i32_0 = arith.constant 0 : i32
    %c0_i32_1 = arith.constant 0 : i32
    return %c0_i32, %c0_i32_0 : i32, i32
  }
  func.func @transform_5(%arg0: i32) -> (i32, i32) {
    %c0_i32 = arith.constant 0 : i32
    %c0_i32_0 = arith.constant 0 : i32
    return %arg0, %c0_i32 : i32, i32
  }
}

</mosaic_0001>

<llo_original>
// kernel: _ffnn_pallas.1
$region0: #{_ffnn_pallas.1}
  #allocation0 [shape = 'u32[]', space=smem, size = 0x4, offset = 0x4, fixed_abs, tag = 'smem constant byte address 0x4 - core index']
  #allocation1 [shape = 'u32[144,128]{1,0:T(1,128)}', space=vmem, size = 0x12000, scoped, tag = 'internal scratch']
  %s0 = inlined_call_operand.vmem [shape: f32[2048,31], index: 0, kind: input, shape index: {}]
  %s1 = inlined_call_operand.vmem [shape: f32[31,32], index: 1, kind: input, shape index: {}]
  %s2 = inlined_call_operand.vmem [shape: f32[1,32], index: 2, kind: input, shape index: {}]
  %s3 = inlined_call_operand.vmem [shape: f32[32,4], index: 3, kind: input, shape index: {}]
  %s4 = inlined_call_operand.vmem [shape: f32[1,4], index: 4, kind: input, shape index: {}]
  %s5 = inlined_call_operand.vmem [shape: f32[2048,4], index: 5, kind: output, shape index: {}]
  %s6 = sld [smem:[#allocation0]]
  $region53: #{_ffnn_pallas.1} parent=0
    _
  %s8 = ssub.s32 1, %s6
  %s9 = scalar_select 0, %s8, %s6
  loop: start=0, step=1, limit=10
  $region2: #{_ffnn_pallas.1} parent=0 // loop_pre_header
    _
  $region3: #{_ffnn_pallas.1} parent=0 // loop_header
    %s11 = sphi 0, %s15
    %p12 = scmp.ge.s32.totalorder %s11, 10
    %s21 = sphi 0, %s23
    %s24 = sphi 0, %s21
    %s25 = sphi 0, %s24
    %s41 = sphi 0, %s25
    %s45 = sphi 0, %s45
    %s47 = sphi 0, %s45
    %s48 = sphi 0, %s47
    %s62 = sphi 0, %s48
    %s66 = sphi 0, %s66
    %s68 = sphi 0, %s66
    %s69 = sphi 0, %s68
    %s83 = sphi 0, %s69
    %s87 = sphi 0, %s87
    %s89 = sphi 0, %s87
    %s90 = sphi 0, %s89
    %s104 = sphi 0, %s90
    %s108 = sphi 0, %s108
    %s110 = sphi 0, %s108
    %s111 = sphi 0, %s110
    %s125 = sphi 0, %s111
    %s131 = sphi 0, %s133
    %s134 = sphi 0, %s131
    %s135 = sphi 0, %s134
    %s151 = sphi 0, %s135
  $region4: #{_ffnn_pallas.1} parent=0 // loop_header_branch
    %14 = sbr.rel (%p12) target = $region8
  $region5: #{_ffnn_pallas.1} parent=0 // loop_body
    %s16 = ssub.s32 %s11, 1
    %s17 = ssub.s32 %s11, 2
    %s18 = sadd.s32 %s11, 1
    %s19 = ssub.s32 %s11, %s18
    %p20 = scmp.eq.s32.totalorder %s19, 0
    %s22 = sadd.s32 %s21, 1
    %s23 = scalar_select %p20, %s21, %s22
    %p26 = pneg %p20
    %p27 = scmp.eq.s32.totalorder %s11, 7
    %p28 = por %p26, %p27
    %p29 = scmp.ne.s32.totalorder %s21, %s24
    %p30 = scmp.eq.s32.totalorder %s11, 0
    %p31 = por %p29, %p30
    %p32 = scmp.ne.s32.totalorder %s21, %s24
    %p33 = scmp.eq.s32.totalorder %s16, 7
    %p34 = por %p32, %p33
    %p35 = scmp.ne.s32.totalorder %s24, %s25
    %p36 = scmp.eq.s32.totalorder %s16, 0
    %p37 = por %p35, %p36
    %p38 = scmp.ne.s32.totalorder %s24, %s25
    %p39 = scmp.eq.s32.totalorder %s17, 7
    %p40 = por %p38, %p39
    %p42 = scmp.ne.s32.totalorder %s25, %s41
    %p43 = scmp.eq.s32.totalorder %s17, 0
    %p44 = por %p42, %p43
    %s46 = sadd.s32 %s45, 1
    %p49 = scmp.eq.s32.totalorder %s11, 7
    %p50 = scmp.ne.s32.totalorder %s45, %s47
    %p51 = scmp.eq.s32.totalorder %s11, 0
    %p52 = por %p50, %p51
    %p53 = scmp.ne.s32.totalorder %s45, %s47
    %p54 = scmp.eq.s32.totalorder %s16, 7
    %p55 = por %p53, %p54
    %p56 = scmp.ne.s32.totalorder %s47, %s48
    %p57 = scmp.eq.s32.totalorder %s16, 0
    %p58 = por %p56, %p57
    %p59 = scmp.ne.s32.totalorder %s47, %s48
    %p60 = scmp.eq.s32.totalorder %s17, 7
    %p61 = por %p59, %p60
    %p63 = scmp.ne.s32.totalorder %s48, %s62
    %p64 = scmp.eq.s32.totalorder %s17, 0
    %p65 = por %p63, %p64
    %s67 = sadd.s32 %s66, 1
    %p70 = scmp.eq.s32.totalorder %s11, 7
    %p71 = scmp.ne.s32.totalorder %s66, %s68
    %p72 = scmp.eq.s32.totalorder %s11, 0
    %p73 = por %p71, %p72
    %p74 = scmp.ne.s32.totalorder %s66, %s68
    %p75 = scmp.eq.s32.totalorder %s16, 7
    %p76 = por %p74, %p75
    %p77 = scmp.ne.s32.totalorder %s68, %s69
    %p78 = scmp.eq.s32.totalorder %s16, 0
    %p79 = por %p77, %p78
    %p80 = scmp.ne.s32.totalorder %s68, %s69
    %p81 = scmp.eq.s32.totalorder %s17, 7
    %p82 = por %p80, %p81
    %p84 = scmp.ne.s32.totalorder %s69, %s83
    %p85 = scmp.eq.s32.totalorder %s17, 0
    %p86 = por %p84, %p85
    %s88 = sadd.s32 %s87, 1
    %p91 = scmp.eq.s32.totalorder %s11, 7
    %p92 = scmp.ne.s32.totalorder %s87, %s89
    %p93 = scmp.eq.s32.totalorder %s11, 0
    %p94 = por %p92, %p93
    %p95 = scmp.ne.s32.totalorder %s87, %s89
    %p96 = scmp.eq.s32.totalorder %s16, 7
    %p97 = por %p95, %p96
    %p98 = scmp.ne.s32.totalorder %s89, %s90
    %p99 = scmp.eq.s32.totalorder %s16, 0
    %p100 = por %p98, %p99
    %p101 = scmp.ne.s32.totalorder %s89, %s90
    %p102 = scmp.eq.s32.totalorder %s17, 7
    %p103 = por %p101, %p102
    %p105 = scmp.ne.s32.totalorder %s90, %s104
    %p106 = scmp.eq.s32.totalorder %s17, 0
    %p107 = por %p105, %p106
    %s109 = sadd.s32 %s108, 1
    %p112 = scmp.eq.s32.totalorder %s11, 7
    %p113 = scmp.ne.s32.totalorder %s108, %s110
    %p114 = scmp.eq.s32.totalorder %s11, 0
    %p115 = por %p113, %p114
    %p116 = scmp.ne.s32.totalorder %s108, %s110
    %p117 = scmp.eq.s32.totalorder %s16, 7
    %p118 = por %p116, %p117
    %p119 = scmp.ne.s32.totalorder %s110, %s111
    %p120 = scmp.eq.s32.totalorder %s16, 0
    %p121 = por %p119, %p120
    %p122 = scmp.ne.s32.totalorder %s110, %s111
    %p123 = scmp.eq.s32.totalorder %s17, 7
    %p124 = por %p122, %p123
    %p126 = scmp.ne.s32.totalorder %s111, %s125
    %p127 = scmp.eq.s32.totalorder %s17, 0
    %p128 = por %p126, %p127
    %s129 = ssub.s32 %s11, %s18
    %p130 = scmp.eq.s32.totalorder %s129, 0
    %s132 = sadd.s32 %s131, 1
    %s133 = scalar_select %p130, %s131, %s132
    %p136 = pneg %p130
    %p137 = scmp.eq.s32.totalorder %s11, 7
    %p138 = por %p136, %p137
    %p139 = scmp.ne.s32.totalorder %s131, %s134
    %p140 = scmp.eq.s32.totalorder %s11, 0
    %p141 = por %p139, %p140
    %p142 = scmp.ne.s32.totalorder %s131, %s134
    %p143 = scmp.eq.s32.totalorder %s16, 7
    %p144 = por %p142, %p143
    %p145 = scmp.ne.s32.totalorder %s134, %s135
    %p146 = scmp.eq.s32.totalorder %s16, 0
    %p147 = por %p145, %p146
    %p148 = scmp.ne.s32.totalorder %s134, %s135
    %p149 = scmp.eq.s32.totalorder %s17, 7
    %p150 = por %p148, %p149
    %p152 = scmp.ne.s32.totalorder %s135, %s151
    %p153 = scmp.eq.s32.totalorder %s17, 0
    %p154 = por %p152, %p153
    %p155 = scmp.le.s32.totalorder 1, %s11
    %p156 = scmp.lt.s32.totalorder %s11, 9
    %p157 = pnand %p155, %p156
    %p158 = pneg %p157
    // Predicated region
    $region9: #{_ffnn_pallas.1} parent=5 // pred_check
      _
    $region10: #{_ffnn_pallas.1} parent=5 // pred_check_branch
      %160 = sbr.rel (%p157) target = $region12
    $region11: #{_ffnn_pallas.1} parent=5 // pred_region
      %s161 = ssub.s32 %s11, 1
      // Predicated region
      $region13: #{_ffnn_pallas.1} parent=11 // pred_check
        %p162 = pneg %p58
      $region14: #{_ffnn_pallas.1} parent=11 // pred_check_branch
        %164 = sbr.rel (%p162) target = $region16
      $region15: #{_ffnn_pallas.1} parent=11 // pred_region
        _
      $region16: #{_ffnn_pallas.1} parent=11 // pred_fallthru
        _
      // Predicated region
      $region17: #{_ffnn_pallas.1} parent=11 // pred_check
        %p165 = pneg %p79
      $region18: #{_ffnn_pallas.1} parent=11 // pred_check_branch
        %167 = sbr.rel (%p165) target = $region20
      $region19: #{_ffnn_pallas.1} parent=11 // pred_region
        _
      $region20: #{_ffnn_pallas.1} parent=11 // pred_fallthru
        _
      // Predicated region
      $region21: #{_ffnn_pallas.1} parent=11 // pred_check
        %p168 = pneg %p100
      $region22: #{_ffnn_pallas.1} parent=11 // pred_check_branch
        %170 = sbr.rel (%p168) target = $region24
      $region23: #{_ffnn_pallas.1} parent=11 // pred_region
        _
      $region24: #{_ffnn_pallas.1} parent=11 // pred_fallthru
        _
      // Predicated region
      $region25: #{_ffnn_pallas.1} parent=11 // pred_check
        %p171 = pneg %p121
      $region26: #{_ffnn_pallas.1} parent=11 // pred_check_branch
        %173 = sbr.rel (%p171) target = $region28
      $region27: #{_ffnn_pallas.1} parent=11 // pred_region
        _
      $region28: #{_ffnn_pallas.1} parent=11 // pred_fallthru
        _
    $region12: #{_ffnn_pallas.1} parent=5 // pred_fallthru
      _
    %p174 = scmp.lt.s32.totalorder %s11, 8
    // Predicated region
    $region29: #{_ffnn_pallas.1} parent=5 // pred_check
      %p175 = pneg %p174
    $region30: #{_ffnn_pallas.1} parent=5 // pred_check_branch
      %177 = sbr.rel (%p175) target = $region32
    $region31: #{_ffnn_pallas.1} parent=5 // pred_region
      // Predicated region
      $region33: #{_ffnn_pallas.1} parent=31 // pred_check
        %p178 = pneg %p31
      $region34: #{_ffnn_pallas.1} parent=31 // pred_check_branch
        %180 = sbr.rel (%p178) target = $region36
      $region35: #{_ffnn_pallas.1} parent=31 // pred_region
        %s181 = smul.u32 32, %s11
        %p182 = scmp.lt.s32.totalorder %s181, 255
        %s183 = scalar_select %p182, %s181, 255
        %s184 = smul.addr %s183, 8
        %s185 = scalar_lea.vmem %s0, %s184
        %s186 = smul.u32 32, %s11
      $region36: #{_ffnn_pallas.1} parent=31 // pred_fallthru
        _
    $region32: #{_ffnn_pallas.1} parent=5 // pred_fallthru
      _
    %p187 = scmp.le.s32.totalorder 1, %s11
    %p188 = scmp.lt.s32.totalorder %s11, 9
    %p189 = pnand %p187, %p188
    %p190 = pneg %p189
    // Predicated region
    $region37: #{_ffnn_pallas.1} parent=5 // pred_check
      _
    $region38: #{_ffnn_pallas.1} parent=5 // pred_check_branch
      %192 = sbr.rel (%p189) target = $region40
    $region39: #{_ffnn_pallas.1} parent=5 // pred_region
      %s193 = ssub.s32 %s11, 1
      %s194 = smul.u32 32, %s16
      %p195 = scmp.lt.s32.totalorder %s194, 255
      %s196 = scalar_select %p195, %s194, 255
      %s197 = smul.addr %s196, 8
      %s198 = scalar_lea.vmem %s0, %s197
      %p199 = pneg %p37
      %p200 = pneg %p34
      %p201 = pneg %p58
      %p202 = pneg %p55
      %p203 = pneg %p79
      %p204 = pneg %p76
      %p205 = pneg %p100
      %p206 = pneg %p97
      %p207 = pneg %p121
      %p208 = pneg %p118
      %p209 = pneg %p147
      %p210 = pneg %p144
      %s211 = smul.u32 32, %s16
      %p212 = scmp.lt.s32.totalorder %s211, 255
      %s213 = scalar_select %p212, %s211, 255
      %s214 = smul.addr %s213, 8
      %s215 = scalar_lea.vmem %s5, %s214
      %s216 = smul.u32 32, %s16
      %p217 = scmp.lt.s32.totalorder %s216, 255
      %s218 = scalar_select %p217, %s216, 255
      %s219 = smul.addr %s218, 8
      %s220 = scalar_lea.vmem %s0, %s219
      %s221 = smul.u32 32, %s16
      %s222 = smul.u32 32, %s16
      %p223 = scmp.lt.s32.totalorder %s222, 255
      %s224 = scalar_select %p223, %s222, 255
      %s225 = smul.addr %s224, 8
      %s226 = scalar_lea.vmem %s5, %s225
      %s227 = smul.u32 32, %s16
      %v229 = vld [vmem:[%s220] sm:$0xff]
      %v230 = vld [vmem:[%s220 + $0x8] sm:$0xff]
      %v231 = vld [vmem:[%s220 + $0x10] sm:$0xff]
      %v232 = vld [vmem:[%s220 + $0x18] sm:$0xff]
      %v233 = vld [vmem:[%s220 + $0x20] sm:$0xff]
      %v234 = vld [vmem:[%s220 + $0x28] sm:$0xff]
      %v235 = vld [vmem:[%s220 + $0x30] sm:$0xff]
      %v236 = vld [vmem:[%s220 + $0x38] sm:$0xff]
      %v237 = vld [vmem:[%s220 + $0x40] sm:$0xff]
      %v238 = vld [vmem:[%s220 + $0x48] sm:$0xff]
      %v239 = vld [vmem:[%s220 + $0x50] sm:$0xff]
      %v240 = vld [vmem:[%s220 + $0x58] sm:$0xff]
      %v241 = vld [vmem:[%s220 + $0x60] sm:$0xff]
      %v242 = vld [vmem:[%s220 + $0x68] sm:$0xff]
      %v243 = vld [vmem:[%s220 + $0x70] sm:$0xff]
      %v244 = vld [vmem:[%s220 + $0x78] sm:$0xff]
      %v245 = vld [vmem:[%s220 + $0x80] sm:$0xff]
      %v246 = vld [vmem:[%s220 + $0x88] sm:$0xff]
      %v247 = vld [vmem:[%s220 + $0x90] sm:$0xff]
      %v248 = vld [vmem:[%s220 + $0x98] sm:$0xff]
      %v249 = vld [vmem:[%s220 + $0xa0] sm:$0xff]
      %v250 = vld [vmem:[%s220 + $0xa8] sm:$0xff]
      %v251 = vld [vmem:[%s220 + $0xb0] sm:$0xff]
      %v252 = vld [vmem:[%s220 + $0xb8] sm:$0xff]
      %v253 = vld [vmem:[%s220 + $0xc0] sm:$0xff]
      %v254 = vld [vmem:[%s220 + $0xc8] sm:$0xff]
      %v255 = vld [vmem:[%s220 + $0xd0] sm:$0xff]
      %v256 = vld [vmem:[%s220 + $0xd8] sm:$0xff]
      %v257 = vld [vmem:[%s220 + $0xe0] sm:$0xff]
      %v258 = vld [vmem:[%s220 + $0xe8] sm:$0xff]
      %v259 = vld [vmem:[%s220 + $0xf0] sm:$0xff]
      %v260 = vld [vmem:[%s220 + $0xf8] sm:$0xff]
      %v261 = vpack.c.bf16 %v230, %v229
      %v262 = vpack.c.bf16 %v232, %v231
      %v263 = vpack.c.bf16 %v234, %v233
      %v264 = vpack.c.bf16 %v236, %v235
      %v265 = vpack.c.bf16 %v238, %v237
      %v266 = vpack.c.bf16 %v240, %v239
      %v267 = vpack.c.bf16 %v242, %v241
      %v268 = vpack.c.bf16 %v244, %v243
      %v269 = vpack.c.bf16 %v246, %v245
      %v270 = vpack.c.bf16 %v248, %v247
      %v271 = vpack.c.bf16 %v250, %v249
      %v272 = vpack.c.bf16 %v252, %v251
      %v273 = vpack.c.bf16 %v254, %v253
      %v274 = vpack.c.bf16 %v256, %v255
      %v275 = vpack.c.bf16 %v258, %v257
      %v276 = vpack.c.bf16 %v260, %v259
      %v277 = vld [vmem:[%s1] sm:$0xff]
      %v278 = vld [vmem:[%s1 + $0x8] sm:$0xff]
      %v279 = vld [vmem:[%s1 + $0x10] sm:$0xff]
      %v280 = vld [vmem:[%s1 + $0x18] sm:$0x7f]
      %v281 = vpack.c.bf16 %v278, %v277
      %v282 = vpack.c.bf16 %v280, %v279
      %v283 = vld [vmem:[%s2] sm:$0x1]
      %v285 = vlaneseq
      %v286 = vshrl.u32 %v285, 7
      %v287 = vsub.s32 0, %v286
      %v288 = vrot.slane %v283, %v287
      %vm290 = vcmask 252928
      %v292 = vsel %vm290, %v261, 0
      %v295 = vsel %vm290, %v262, 0
      %v298 = vsel %vm290, %v263, 0
      %v301 = vsel %vm290, %v264, 0
      %v304 = vsel %vm290, %v265, 0
      %v307 = vsel %vm290, %v266, 0
      %v310 = vsel %vm290, %v267, 0
      %v313 = vsel %vm290, %v268, 0
      %v316 = vsel %vm290, %v269, 0
      %v319 = vsel %vm290, %v270, 0
      %v322 = vsel %vm290, %v271, 0
      %v325 = vsel %vm290, %v272, 0
      %v328 = vsel %vm290, %v273, 0
      %v331 = vsel %vm290, %v274, 0
      %v334 = vsel %vm290, %v275, 0
      %v337 = vsel %vm290, %v276, 0
      %vm339 = vcmask 1046528
      %vm340 = vcmask 1047552
      %v341 = vsel %vm339, 4294967295, 65535
      %v342 = vsel %vm340, %v341, 0
      %v344 = vand.u32 %v282, %v342
      %346 = vmatprep.subr.bf16.mxu0 0
      %347 = vmatpush1.bf16.msra.mxu0 %v281
      %348 = vmatprep.subr.bf16.mxu0 0
      %349 = vmatpush1.bf16.msra.mxu0 %v344
      %350 = vmatprep.subr.bf16.mxu0 0
      %351 = vmatpush1.bf16.msra.mxu0 0
      %352 = vmatprep.subr.bf16.mxu0 0
      %353 = vmatpush1.bf16.msra.mxu0 0
      %354 = vmatprep.subr.bf16.mxu0 0
      %355 = vmatpush1.bf16.msra.mxu0 0
      %356 = vmatprep.subr.bf16.mxu0 0
      %357 = vmatpush1.bf16.msra.mxu0 0
      %358 = vmatprep.subr.bf16.mxu0 0
      %359 = vmatpush1.bf16.msra.mxu0 0
      %360 = vmatprep.subr.bf16.mxu0 0
      %361 = vmatpush1.bf16.msra.mxu0 0
      %362 = vmatprep.subr.bf16.mxu0 0
      %363 = vmatpush1.bf16.msra.mxu0 0
      %364 = vmatprep.subr.bf16.mxu0 0
      %365 = vmatpush1.bf16.msra.mxu0 0
      %366 = vmatprep.subr.bf16.mxu0 0
      %367 = vmatpush1.bf16.msra.mxu0 0
      %368 = vmatprep.subr.bf16.mxu0 0
      %369 = vmatpush1.bf16.msra.mxu0 0
      %370 = vmatprep.subr.bf16.mxu0 0
      %371 = vmatpush1.bf16.msra.mxu0 0
      %372 = vmatprep.subr.bf16.mxu0 0
      %373 = vmatpush1.bf16.msra.mxu0 0
      %374 = vmatprep.subr.bf16.mxu0 0
      %375 = vmatpush1.bf16.msra.mxu0 0
      %376 = vmatprep.subr.bf16.mxu0 0
      %377 = vmatpush1.bf16.msra.mxu0 0
      %378 = vmatprep.mubr.bf16.mxu0 0
      %379 = vmatmul.mubr.bf16.gmra.mrb[0].mxu0 %v292
      %v380 = vpop.f32.mrb[0].mxu0
      %v381 = vadd.f32 %v288, %v380
      %v382 = vpop.f32.mrb[0].mxu0
      %v383 = vpop.f32.mrb[0].mxu0
      %v384 = vadd.f32 %v288, %v383
      %v385 = vpop.f32.mrb[0].mxu0
      %386 = vmatprep.mubr.bf16.mxu0 0
      %387 = vmatmul.mubr.bf16.gmra.mrb[0].mxu0 %v295
      %v388 = vpop.f32.mrb[0].mxu0
      %v389 = vadd.f32 %v288, %v388
      %v390 = vpop.f32.mrb[0].mxu0
      %v391 = vpop.f32.mrb[0].mxu0
      %v392 = vadd.f32 %v288, %v391
      %v393 = vpop.f32.mrb[0].mxu0
      %394 = vmatprep.mubr.bf16.mxu0 0
      %395 = vmatmul.mubr.bf16.gmra.mrb[0].mxu0 %v298
      %v396 = vpop.f32.mrb[0].mxu0
      %v397 = vadd.f32 %v288, %v396
      %v398 = vpop.f32.mrb[0].mxu0
      %v399 = vpop.f32.mrb[0].mxu0
      %v400 = vadd.f32 %v288, %v399
      %v401 = vpop.f32.mrb[0].mxu0
      %402 = vmatprep.mubr.bf16.mxu0 0
      %403 = vmatmul.mubr.bf16.gmra.mrb[0].mxu0 %v301
      %v404 = vpop.f32.mrb[0].mxu0
      %v405 = vadd.f32 %v288, %v404
      %v406 = vpop.f32.mrb[0].mxu0
      %v407 = vpop.f32.mrb[0].mxu0
      %v408 = vadd.f32 %v288, %v407
      %v409 = vpop.f32.mrb[0].mxu0
      %410 = vmatprep.mubr.bf16.mxu0 0
      %411 = vmatmul.mubr.bf16.gmra.mrb[0].mxu0 %v304
      %v412 = vpop.f32.mrb[0].mxu0
      %v413 = vadd.f32 %v288, %v412
      %v414 = vpop.f32.mrb[0].mxu0
      %v415 = vpop.f32.mrb[0].mxu0
      %v416 = vadd.f32 %v288, %v415
      %v417 = vpop.f32.mrb[0].mxu0
      %418 = vmatprep.mubr.bf16.mxu0 0
      %419 = vmatmul.mubr.bf16.gmra.mrb[0].mxu0 %v307
      %v420 = vpop.f32.mrb[0].mxu0
      %v421 = vadd.f32 %v288, %v420
      %v422 = vpop.f32.mrb[0].mxu0
      %v423 = vpop.f32.mrb[0].mxu0
      %v424 = vadd.f32 %v288, %v423
      %v425 = vpop.f32.mrb[0].mxu0
      %426 = vmatprep.mubr.bf16.mxu0 0
      %427 = vmatmul.mubr.bf16.gmra.mrb[0].mxu0 %v310
      %v428 = vpop.f32.mrb[0].mxu0
      %v429 = vadd.f32 %v288, %v428
      %v430 = vpop.f32.mrb[0].mxu0
      %v431 = vpop.f32.mrb[0].mxu0
      %v432 = vadd.f32 %v288, %v431
      %v433 = vpop.f32.mrb[0].mxu0
      %434 = vmatprep.mubr.bf16.mxu0 0
      %435 = vmatmul.mubr.bf16.gmra.mrb[0].mxu0 %v313
      %v436 = vpop.f32.mrb[0].mxu0
      %v437 = vadd.f32 %v288, %v436
      %v438 = vpop.f32.mrb[0].mxu0
      %v439 = vpop.f32.mrb[0].mxu0
      %v440 = vadd.f32 %v288, %v439
      %v441 = vpop.f32.mrb[0].mxu0
      %442 = vmatprep.mubr.bf16.mxu0 0
      %443 = vmatmul.mubr.bf16.gmra.mrb[0].mxu0 %v316
      %v444 = vpop.f32.mrb[0].mxu0
      %v445 = vadd.f32 %v288, %v444
      %v446 = vpop.f32.mrb[0].mxu0
      %v447 = vpop.f32.mrb[0].mxu0
      %v448 = vadd.f32 %v288, %v447
      %v449 = vpop.f32.mrb[0].mxu0
      %450 = vmatprep.mubr.bf16.mxu0 0
      %451 = vmatmul.mubr.bf16.gmra.mrb[0].mxu0 %v319
      %v452 = vpop.f32.mrb[0].mxu0
      %v453 = vadd.f32 %v288, %v452
      %v454 = vpop.f32.mrb[0].mxu0
      %v455 = vpop.f32.mrb[0].mxu0
      %v456 = vadd.f32 %v288, %v455
      %v457 = vpop.f32.mrb[0].mxu0
      %458 = vmatprep.mubr.bf16.mxu0 0
      %459 = vmatmul.mubr.bf16.gmra.mrb[0].mxu0 %v322
      %v460 = vpop.f32.mrb[0].mxu0
      %v461 = vadd.f32 %v288, %v460
      %v462 = vpop.f32.mrb[0].mxu0
      %v463 = vpop.f32.mrb[0].mxu0
      %v464 = vadd.f32 %v288, %v463
      %v465 = vpop.f32.mrb[0].mxu0
      %466 = vmatprep.mubr.bf16.mxu0 0
      %467 = vmatmul.mubr.bf16.gmra.mrb[0].mxu0 %v325
      %v468 = vpop.f32.mrb[0].mxu0
      %v469 = vadd.f32 %v288, %v468
      %v470 = vpop.f32.mrb[0].mxu0
      %v471 = vpop.f32.mrb[0].mxu0
      %v472 = vadd.f32 %v288, %v471
      %v473 = vpop.f32.mrb[0].mxu0
      %474 = vmatprep.mubr.bf16.mxu0 0
      %475 = vmatmul.mubr.bf16.gmra.mrb[0].mxu0 %v328
      %v476 = vpop.f32.mrb[0].mxu0
      %v477 = vadd.f32 %v288, %v476
      %v478 = vpop.f32.mrb[0].mxu0
      %v479 = vpop.f32.mrb[0].mxu0
      %v480 = vadd.f32 %v288, %v479
      %v481 = vpop.f32.mrb[0].mxu0
      %482 = vmatprep.mubr.bf16.mxu0 0
      %483 = vmatmul.mubr.bf16.gmra.mrb[0].mxu0 %v331
      %v484 = vpop.f32.mrb[0].mxu0
      %v485 = vadd.f32 %v288, %v484
      %v486 = vpop.f32.mrb[0].mxu0
      %v487 = vpop.f32.mrb[0].mxu0
      %v488 = vadd.f32 %v288, %v487
      %v489 = vpop.f32.mrb[0].mxu0
      %490 = vmatprep.mubr.bf16.mxu0 0
      %491 = vmatmul.mubr.bf16.gmra.mrb[0].mxu0 %v334
      %v492 = vpop.f32.mrb[0].mxu0
      %v493 = vadd.f32 %v288, %v492
      %v494 = vpop.f32.mrb[0].mxu0
      %v495 = vpop.f32.mrb[0].mxu0
      %v496 = vadd.f32 %v288, %v495
      %v497 = vpop.f32.mrb[0].mxu0
      %498 = vmatprep.mubr.bf16.mxu0 0
      %499 = vmatmul.mubr.bf16.gmra.mrb[0].mxu0 %v337
      %v500 = vpop.f32.mrb[0].mxu0
      %v501 = vadd.f32 %v288, %v500
      %v502 = vpop.f32.mrb[0].mxu0
      %v503 = vpop.f32.mrb[0].mxu0
      %v504 = vadd.f32 %v288, %v503
      %v505 = vpop.f32.mrb[0].mxu0
      %506 = vdwg.mxu0
      %v507 = vxor.u32 %v381, 2147483648
      %v508 = vxor.u32 %v384, 2147483648
      %v509 = vxor.u32 %v389, 2147483648
      %v510 = vxor.u32 %v392, 2147483648
      %v511 = vxor.u32 %v397, 2147483648
      %v512 = vxor.u32 %v400, 2147483648
      %v513 = vxor.u32 %v405, 2147483648
      %v514 = vxor.u32 %v408, 2147483648
      %v515 = vxor.u32 %v413, 2147483648
      %v516 = vxor.u32 %v416, 2147483648
      %v517 = vxor.u32 %v421, 2147483648
      %v518 = vxor.u32 %v424, 2147483648
      %v519 = vxor.u32 %v429, 2147483648
      %v520 = vxor.u32 %v432, 2147483648
      %v521 = vxor.u32 %v437, 2147483648
      %v522 = vxor.u32 %v440, 2147483648
      %v523 = vxor.u32 %v445, 2147483648
      %v524 = vxor.u32 %v448, 2147483648
      %v525 = vxor.u32 %v453, 2147483648
      %v526 = vxor.u32 %v456, 2147483648
      %v527 = vxor.u32 %v461, 2147483648
      %v528 = vxor.u32 %v464, 2147483648
      %v529 = vxor.u32 %v469, 2147483648
      %v530 = vxor.u32 %v472, 2147483648
      %v531 = vxor.u32 %v477, 2147483648
      %v532 = vxor.u32 %v480, 2147483648
      %v533 = vxor.u32 %v485, 2147483648
      %v534 = vxor.u32 %v488, 2147483648
      %v535 = vxor.u32 %v493, 2147483648
      %v536 = vxor.u32 %v496, 2147483648
      %v537 = vxor.u32 %v501, 2147483648
      %v538 = vxor.u32 %v504, 2147483648
      %v539 = vmul.f32 %v507, 1.442695
      %v540 = vpow.pop %v539
      %v541 = vmul.f32 %v508, 1.442695
      %v542 = vpow.pop %v541
      %v543 = vmul.f32 %v509, 1.442695
      %v544 = vpow.pop %v543
      %v545 = vmul.f32 %v510, 1.442695
      %v546 = vpow.pop %v545
      %v547 = vmul.f32 %v511, 1.442695
      %v548 = vpow.pop %v547
      %v549 = vmul.f32 %v512, 1.442695
      %v550 = vpow.pop %v549
      %v551 = vmul.f32 %v513, 1.442695
      %v552 = vpow.pop %v551
      %v553 = vmul.f32 %v514, 1.442695
      %v554 = vpow.pop %v553
      %v555 = vmul.f32 %v515, 1.442695
      %v556 = vpow.pop %v555
      %v557 = vmul.f32 %v516, 1.442695
      %v558 = vpow.pop %v557
      %v559 = vmul.f32 %v517, 1.442695
      %v560 = vpow.pop %v559
      %v561 = vmul.f32 %v518, 1.442695
      %v562 = vpow.pop %v561
      %v563 = vmul.f32 %v519, 1.442695
      %v564 = vpow.pop %v563
      %v565 = vmul.f32 %v520, 1.442695
      %v566 = vpow.pop %v565
      %v567 = vmul.f32 %v521, 1.442695
      %v568 = vpow.pop %v567
      %v569 = vmul.f32 %v522, 1.442695
      %v570 = vpow.pop %v569
      %v571 = vmul.f32 %v523, 1.442695
      %v572 = vpow.pop %v571
      %v573 = vmul.f32 %v524, 1.442695
      %v574 = vpow.pop %v573
      %v575 = vmul.f32 %v525, 1.442695
      %v576 = vpow.pop %v575
      %v577 = vmul.f32 %v526, 1.442695
      %v578 = vpow.pop %v577
      %v579 = vmul.f32 %v527, 1.442695
      %v580 = vpow.pop %v579
      %v581 = vmul.f32 %v528, 1.442695
      %v582 = vpow.pop %v581
      %v583 = vmul.f32 %v529, 1.442695
      %v584 = vpow.pop %v583
      %v585 = vmul.f32 %v530, 1.442695
      %v586 = vpow.pop %v585
      %v587 = vmul.f32 %v531, 1.442695
      %v588 = vpow.pop %v587
      %v589 = vmul.f32 %v532, 1.442695
      %v590 = vpow.pop %v589
      %v591 = vmul.f32 %v533, 1.442695
      %v592 = vpow.pop %v591
      %v593 = vmul.f32 %v534, 1.442695
      %v594 = vpow.pop %v593
      %v595 = vmul.f32 %v535, 1.442695
      %v596 = vpow.pop %v595
      %v597 = vmul.f32 %v536, 1.442695
      %v598 = vpow.pop %v597
      %v599 = vmul.f32 %v537, 1.442695
      %v600 = vpow.pop %v599
      %v601 = vmul.f32 %v538, 1.442695
      %v602 = vpow.pop %v601
      %v603 = vadd.f32 %v540, 1.0
      %v604 = vadd.f32 %v542, 1.0
      %v605 = vadd.f32 %v544, 1.0
      %v606 = vadd.f32 %v546, 1.0
      %v607 = vadd.f32 %v548, 1.0
      %v608 = vadd.f32 %v550, 1.0
      %v609 = vadd.f32 %v552, 1.0
      %v610 = vadd.f32 %v554, 1.0
      %v611 = vadd.f32 %v556, 1.0
      %v612 = vadd.f32 %v558, 1.0
      %v613 = vadd.f32 %v560, 1.0
      %v614 = vadd.f32 %v562, 1.0
      %v615 = vadd.f32 %v564, 1.0
      %v616 = vadd.f32 %v566, 1.0
      %v617 = vadd.f32 %v568, 1.0
      %v618 = vadd.f32 %v570, 1.0
      %v619 = vadd.f32 %v572, 1.0
      %v620 = vadd.f32 %v574, 1.0
      %v621 = vadd.f32 %v576, 1.0
      %v622 = vadd.f32 %v578, 1.0
      %v623 = vadd.f32 %v580, 1.0
      %v624 = vadd.f32 %v582, 1.0
      %v625 = vadd.f32 %v584, 1.0
      %v626 = vadd.f32 %v586, 1.0
      %v627 = vadd.f32 %v588, 1.0
      %v628 = vadd.f32 %v590, 1.0
      %v629 = vadd.f32 %v592, 1.0
      %v630 = vadd.f32 %v594, 1.0
      %v631 = vadd.f32 %v596, 1.0
      %v632 = vadd.f32 %v598, 1.0
      %v633 = vadd.f32 %v600, 1.0
      %v634 = vadd.f32 %v602, 1.0
      %v635 = vrcp.pop %v603
      %v636 = vmul.f32 1.0, %v635
      %v637 = vrcp.pop %v604
      %v638 = vmul.f32 1.0, %v637
      %v639 = vrcp.pop %v605
      %v640 = vmul.f32 1.0, %v639
      %v641 = vrcp.pop %v606
      %v642 = vmul.f32 1.0, %v641
      %v643 = vrcp.pop %v607
      %v644 = vmul.f32 1.0, %v643
      %v645 = vrcp.pop %v608
      %v646 = vmul.f32 1.0, %v645
      %v647 = vrcp.pop %v609
      %v648 = vmul.f32 1.0, %v647
      %v649 = vrcp.pop %v610
      %v650 = vmul.f32 1.0, %v649
      %v651 = vrcp.pop %v611
      %v652 = vmul.f32 1.0, %v651
      %v653 = vrcp.pop %v612
      %v654 = vmul.f32 1.0, %v653
      %v655 = vrcp.pop %v613
      %v656 = vmul.f32 1.0, %v655
      %v657 = vrcp.pop %v614
      %v658 = vmul.f32 1.0, %v657
      %v659 = vrcp.pop %v615
      %v660 = vmul.f32 1.0, %v659
      %v661 = vrcp.pop %v616
      %v662 = vmul.f32 1.0, %v661
      %v663 = vrcp.pop %v617
      %v664 = vmul.f32 1.0, %v663
      %v665 = vrcp.pop %v618
      %v666 = vmul.f32 1.0, %v665
      %v667 = vrcp.pop %v619
      %v668 = vmul.f32 1.0, %v667
      %v669 = vrcp.pop %v620
      %v670 = vmul.f32 1.0, %v669
      %v671 = vrcp.pop %v621
      %v672 = vmul.f32 1.0, %v671
      %v673 = vrcp.pop %v622
      %v674 = vmul.f32 1.0, %v673
      %v675 = vrcp.pop %v623
      %v676 = vmul.f32 1.0, %v675
      %v677 = vrcp.pop %v624
      %v678 = vmul.f32 1.0, %v677
      %v679 = vrcp.pop %v625
      %v680 = vmul.f32 1.0, %v679
      %v681 = vrcp.pop %v626
      %v682 = vmul.f32 1.0, %v681
      %v683 = vrcp.pop %v627
      %v684 = vmul.f32 1.0, %v683
      %v685 = vrcp.pop %v628
      %v686 = vmul.f32 1.0, %v685
      %v687 = vrcp.pop %v629
      %v688 = vmul.f32 1.0, %v687
      %v689 = vrcp.pop %v630
      %v690 = vmul.f32 1.0, %v689
      %v691 = vrcp.pop %v631
      %v692 = vmul.f32 1.0, %v691
      %v693 = vrcp.pop %v632
      %v694 = vmul.f32 1.0, %v693
      %v695 = vrcp.pop %v633
      %v696 = vmul.f32 1.0, %v695
      %v697 = vrcp.pop %v634
      %v698 = vmul.f32 1.0, %v697
      %v699 = vld [vmem:[%s3] sm:$0xff]
      %v700 = vld [vmem:[%s3 + $0x8] sm:$0xff]
      %v701 = vld [vmem:[%s3 + $0x10] sm:$0xff]
      %v702 = vld [vmem:[%s3 + $0x18] sm:$0xff]
      %v703 = vld [vmem:[%s4] sm:$0x1]
      %v705 = vlaneseq
      %v706 = vshrl.u32 %v705, 7
      %v707 = vsub.s32 0, %v706
      %v708 = vrot.slane %v703, %v707
      %vm710 = vcmask 261120
      %v712 = vsel %vm710, %v636, 0
      %v715 = vsel %vm710, %v638, 0
      %v718 = vsel %vm710, %v640, 0
      %v721 = vsel %vm710, %v642, 0
      %v724 = vsel %vm710, %v644, 0
      %v727 = vsel %vm710, %v646, 0
      %v730 = vsel %vm710, %v648, 0
      %v733 = vsel %vm710, %v650, 0
      %v736 = vsel %vm710, %v652, 0
      %v739 = vsel %vm710, %v654, 0
      %v742 = vsel %vm710, %v656, 0
      %v745 = vsel %vm710, %v658, 0
      %v748 = vsel %vm710, %v660, 0
      %v751 = vsel %vm710, %v662, 0
      %v754 = vsel %vm710, %v664, 0
      %v757 = vsel %vm710, %v666, 0
      %v760 = vsel %vm710, %v668, 0
      %v763 = vsel %vm710, %v670, 0
      %v766 = vsel %vm710, %v672, 0
      %v769 = vsel %vm710, %v674, 0
      %v772 = vsel %vm710, %v676, 0
      %v775 = vsel %vm710, %v678, 0
      %v778 = vsel %vm710, %v680, 0
      %v781 = vsel %vm710, %v682, 0
      %v784 = vsel %vm710, %v684, 0
      %v787 = vsel %vm710, %v686, 0
      %v790 = vsel %vm710, %v688, 0
      %v793 = vsel %vm710, %v690, 0
      %v796 = vsel %vm710, %v692, 0
      %v799 = vsel %vm710, %v694, 0
      %v802 = vsel %vm710, %v696, 0
      %v805 = vsel %vm710, %v698, 0
      %807 = vmatprep.subr.mxu0 0.0
      %808 = vmatpush1.msra.mxu0 %v699
      %809 = vmatprep.subr.mxu0 0.0
      %810 = vmatpush1.msra.mxu0 %v700
      %811 = vmatprep.subr.mxu0 0.0
      %812 = vmatpush1.msra.mxu0 %v701
      %813 = vmatprep.subr.mxu0 0.0
      %814 = vmatpush1.msra.mxu0 %v702
      %815 = vmatprep.subr.mxu0 0.0
      %816 = vmatpush1.msra.mxu0 0.0
      %817 = vmatprep.subr.mxu0 0.0
      %818 = vmatpush1.msra.mxu0 0.0
      %819 = vmatprep.subr.mxu0 0.0
      %820 = vmatpush1.msra.mxu0 0.0
      %821 = vmatprep.subr.mxu0 0.0
      %822 = vmatpush1.msra.mxu0 0.0
      %823 = vmatprep.subr.mxu0 0.0
      %824 = vmatpush1.msra.mxu0 0.0
      %825 = vmatprep.subr.mxu0 0.0
      %826 = vmatpush1.msra.mxu0 0.0
      %827 = vmatprep.subr.mxu0 0.0
      %828 = vmatpush1.msra.mxu0 0.0
      %829 = vmatprep.subr.mxu0 0.0
      %830 = vmatpush1.msra.mxu0 0.0
      %831 = vmatprep.subr.mxu0 0.0
      %832 = vmatpush1.msra.mxu0 0.0
      %833 = vmatprep.subr.mxu0 0.0
      %834 = vmatpush1.msra.mxu0 0.0
      %835 = vmatprep.subr.mxu0 0.0
      %836 = vmatpush1.msra.mxu0 0.0
      %837 = vmatprep.subr.mxu0 0.0
      %838 = vmatpush1.msra.mxu0 0.0
      %839 = vmatprep.subr.mxu0 0.0
      %840 = vmatpush1.msra.mxu0 0.0
      %841 = vmatprep.subr.mxu0 0.0
      %842 = vmatpush1.msra.mxu0 0.0
      %843 = vmatprep.subr.mxu0 0.0
      %844 = vmatpush1.msra.mxu0 0.0
      %845 = vmatprep.subr.mxu0 0.0
      %846 = vmatpush1.msra.mxu0 0.0
      %847 = vmatprep.subr.mxu0 0.0
      %848 = vmatpush1.msra.mxu0 0.0
      %849 = vmatprep.subr.mxu0 0.0
      %850 = vmatpush1.msra.mxu0 0.0
      %851 = vmatprep.subr.mxu0 0.0
      %852 = vmatpush1.msra.mxu0 0.0
      %853 = vmatprep.subr.mxu0 0.0
      %854 = vmatpush1.msra.mxu0 0.0
      %855 = vmatprep.subr.mxu0 0.0
      %856 = vmatpush1.msra.mxu0 0.0
      %857 = vmatprep.subr.mxu0 0.0
      %858 = vmatpush1.msra.mxu0 0.0
      %859 = vmatprep.subr.mxu0 0.0
      %860 = vmatpush1.msra.mxu0 0.0
      %861 = vmatprep.subr.mxu0 0.0
      %862 = vmatpush1.msra.mxu0 0.0
      %863 = vmatprep.subr.mxu0 0.0
      %864 = vmatpush1.msra.mxu0 0.0
      %865 = vmatprep.subr.mxu0 0.0
      %866 = vmatpush1.msra.mxu0 0.0
      %867 = vmatprep.subr.mxu0 0.0
      %868 = vmatpush1.msra.mxu0 0.0
      %869 = vmatprep.subr.mxu0 0.0
      %870 = vmatpush1.msra.mxu0 0.0
      %871 = vmatprep.mubr.f32.mxu0 0.0
      %872 = vmatmul.mubr.f32.gmra.mrb[0].mxu0 %v712
      %v873 = vpop.f32.mrb[0].mxu0
      %v874 = vadd.f32 %v708, %v873
      %v875 = vpop.f32.mrb[0].mxu0
      %876 = vmatprep.mubr.f32.mxu0 0.0
      %877 = vmatmul.mubr.f32.gmra.mrb[0].mxu0 %v715
      %v878 = vpop.f32.mrb[0].mxu0
      %v879 = vadd.f32 %v708, %v878
      %v880 = vpop.f32.mrb[0].mxu0
      %881 = vmatprep.mubr.f32.mxu0 0.0
      %882 = vmatmul.mubr.f32.gmra.mrb[0].mxu0 %v718
      %v883 = vpop.f32.mrb[0].mxu0
      %v884 = vadd.f32 %v708, %v883
      %v885 = vpop.f32.mrb[0].mxu0
      %886 = vmatprep.mubr.f32.mxu0 0.0
      %887 = vmatmul.mubr.f32.gmra.mrb[0].mxu0 %v721
      %v888 = vpop.f32.mrb[0].mxu0
      %v889 = vadd.f32 %v708, %v888
      %v890 = vpop.f32.mrb[0].mxu0
      %891 = vmatprep.mubr.f32.mxu0 0.0
      %892 = vmatmul.mubr.f32.gmra.mrb[0].mxu0 %v724
      %v893 = vpop.f32.mrb[0].mxu0
      %v894 = vadd.f32 %v708, %v893
      %v895 = vpop.f32.mrb[0].mxu0
      %896 = vmatprep.mubr.f32.mxu0 0.0
      %897 = vmatmul.mubr.f32.gmra.mrb[0].mxu0 %v727
      %v898 = vpop.f32.mrb[0].mxu0
      %v899 = vadd.f32 %v708, %v898
      %v900 = vpop.f32.mrb[0].mxu0
      %901 = vmatprep.mubr.f32.mxu0 0.0
      %902 = vmatmul.mubr.f32.gmra.mrb[0].mxu0 %v730
      %v903 = vpop.f32.mrb[0].mxu0
      %v904 = vadd.f32 %v708, %v903
      %v905 = vpop.f32.mrb[0].mxu0
      %906 = vmatprep.mubr.f32.mxu0 0.0
      %907 = vmatmul.mubr.f32.gmra.mrb[0].mxu0 %v733
      %v908 = vpop.f32.mrb[0].mxu0
      %v909 = vadd.f32 %v708, %v908
      %v910 = vpop.f32.mrb[0].mxu0
      %911 = vmatprep.mubr.f32.mxu0 0.0
      %912 = vmatmul.mubr.f32.gmra.mrb[0].mxu0 %v736
      %v913 = vpop.f32.mrb[0].mxu0
      %v914 = vadd.f32 %v708, %v913
      %v915 = vpop.f32.mrb[0].mxu0
      %916 = vmatprep.mubr.f32.mxu0 0.0
      %917 = vmatmul.mubr.f32.gmra.mrb[0].mxu0 %v739
      %v918 = vpop.f32.mrb[0].mxu0
      %v919 = vadd.f32 %v708, %v918
      %v920 = vpop.f32.mrb[0].mxu0
      %921 = vmatprep.mubr.f32.mxu0 0.0
      %922 = vmatmul.mubr.f32.gmra.mrb[0].mxu0 %v742
      %v923 = vpop.f32.mrb[0].mxu0
      %v924 = vadd.f32 %v708, %v923
      %v925 = vpop.f32.mrb[0].mxu0
      %926 = vmatprep.mubr.f32.mxu0 0.0
      %927 = vmatmul.mubr.f32.gmra.mrb[0].mxu0 %v745
      %v928 = vpop.f32.mrb[0].mxu0
      %v929 = vadd.f32 %v708, %v928
      %v930 = vpop.f32.mrb[0].mxu0
      %931 = vmatprep.mubr.f32.mxu0 0.0
      %932 = vmatmul.mubr.f32.gmra.mrb[0].mxu0 %v748
      %v933 = vpop.f32.mrb[0].mxu0
      %v934 = vadd.f32 %v708, %v933
      %v935 = vpop.f32.mrb[0].mxu0
      %936 = vmatprep.mubr.f32.mxu0 0.0
      %937 = vmatmul.mubr.f32.gmra.mrb[0].mxu0 %v751
      %v938 = vpop.f32.mrb[0].mxu0
      %v939 = vadd.f32 %v708, %v938
      %v940 = vpop.f32.mrb[0].mxu0
      %941 = vmatprep.mubr.f32.mxu0 0.0
      %942 = vmatmul.mubr.f32.gmra.mrb[0].mxu0 %v754
      %v943 = vpop.f32.mrb[0].mxu0
      %v944 = vadd.f32 %v708, %v943
      %v945 = vpop.f32.mrb[0].mxu0
      %946 = vmatprep.mubr.f32.mxu0 0.0
      %947 = vmatmul.mubr.f32.gmra.mrb[0].mxu0 %v757
      %v948 = vpop.f32.mrb[0].mxu0
      %v949 = vadd.f32 %v708, %v948
      %v950 = vpop.f32.mrb[0].mxu0
      %951 = vmatprep.mubr.f32.mxu0 0.0
      %952 = vmatmul.mubr.f32.gmra.mrb[0].mxu0 %v760
      %v953 = vpop.f32.mrb[0].mxu0
      %v954 = vadd.f32 %v708, %v953
      %v955 = vpop.f32.mrb[0].mxu0
      %956 = vmatprep.mubr.f32.mxu0 0.0
      %957 = vmatmul.mubr.f32.gmra.mrb[0].mxu0 %v763
      %v958 = vpop.f32.mrb[0].mxu0
      %v959 = vadd.f32 %v708, %v958
      %v960 = vpop.f32.mrb[0].mxu0
      %961 = vmatprep.mubr.f32.mxu0 0.0
      %962 = vmatmul.mubr.f32.gmra.mrb[0].mxu0 %v766
      %v963 = vpop.f32.mrb[0].mxu0
      %v964 = vadd.f32 %v708, %v963
      %v965 = vpop.f32.mrb[0].mxu0
      %966 = vmatprep.mubr.f32.mxu0 0.0
      %967 = vmatmul.mubr.f32.gmra.mrb[0].mxu0 %v769
      %v968 = vpop.f32.mrb[0].mxu0
      %v969 = vadd.f32 %v708, %v968
      %v970 = vpop.f32.mrb[0].mxu0
      %971 = vmatprep.mubr.f32.mxu0 0.0
      %972 = vmatmul.mubr.f32.gmra.mrb[0].mxu0 %v772
      %v973 = vpop.f32.mrb[0].mxu0
      %v974 = vadd.f32 %v708, %v973
      %v975 = vpop.f32.mrb[0].mxu0
      %976 = vmatprep.mubr.f32.mxu0 0.0
      %977 = vmatmul.mubr.f32.gmra.mrb[0].mxu0 %v775
      %v978 = vpop.f32.mrb[0].mxu0
      %v979 = vadd.f32 %v708, %v978
      %v980 = vpop.f32.mrb[0].mxu0
      %981 = vmatprep.mubr.f32.mxu0 0.0
      %982 = vmatmul.mubr.f32.gmra.mrb[0].mxu0 %v778
      %v983 = vpop.f32.mrb[0].mxu0
      %v984 = vadd.f32 %v708, %v983
      %v985 = vpop.f32.mrb[0].mxu0
      %986 = vmatprep.mubr.f32.mxu0 0.0
      %987 = vmatmul.mubr.f32.gmra.mrb[0].mxu0 %v781
      %v988 = vpop.f32.mrb[0].mxu0
      %v989 = vadd.f32 %v708, %v988
      %v990 = vpop.f32.mrb[0].mxu0
      %991 = vmatprep.mubr.f32.mxu0 0.0
      %992 = vmatmul.mubr.f32.gmra.mrb[0].mxu0 %v784
      %v993 = vpop.f32.mrb[0].mxu0
      %v994 = vadd.f32 %v708, %v993
      %v995 = vpop.f32.mrb[0].mxu0
      %996 = vmatprep.mubr.f32.mxu0 0.0
      %997 = vmatmul.mubr.f32.gmra.mrb[0].mxu0 %v787
      %v998 = vpop.f32.mrb[0].mxu0
      %v999 = vadd.f32 %v708, %v998
      %v1000 = vpop.f32.mrb[0].mxu0
      %1001 = vmatprep.mubr.f32.mxu0 0.0
      %1002 = vmatmul.mubr.f32.gmra.mrb[0].mxu0 %v790
      %v1003 = vpop.f32.mrb[0].mxu0
      %v1004 = vadd.f32 %v708, %v1003
      %v1005 = vpop.f32.mrb[0].mxu0
      %1006 = vmatprep.mubr.f32.mxu0 0.0
      %1007 = vmatmul.mubr.f32.gmra.mrb[0].mxu0 %v793
      %v1008 = vpop.f32.mrb[0].mxu0
      %v1009 = vadd.f32 %v708, %v1008
      %v1010 = vpop.f32.mrb[0].mxu0
      %1011 = vmatprep.mubr.f32.mxu0 0.0
      %1012 = vmatmul.mubr.f32.gmra.mrb[0].mxu0 %v796
      %v1013 = vpop.f32.mrb[0].mxu0
      %v1014 = vadd.f32 %v708, %v1013
      %v1015 = vpop.f32.mrb[0].mxu0
      %1016 = vmatprep.mubr.f32.mxu0 0.0
      %1017 = vmatmul.mubr.f32.gmra.mrb[0].mxu0 %v799
      %v1018 = vpop.f32.mrb[0].mxu0
      %v1019 = vadd.f32 %v708, %v1018
      %v1020 = vpop.f32.mrb[0].mxu0
      %1021 = vmatprep.mubr.f32.mxu0 0.0
      %1022 = vmatmul.mubr.f32.gmra.mrb[0].mxu0 %v802
      %v1023 = vpop.f32.mrb[0].mxu0
      %v1024 = vadd.f32 %v708, %v1023
      %v1025 = vpop.f32.mrb[0].mxu0
      %1026 = vmatprep.mubr.f32.mxu0 0.0
      %1027 = vmatmul.mubr.f32.gmra.mrb[0].mxu0 %v805
      %v1028 = vpop.f32.mrb[0].mxu0
      %v1029 = vadd.f32 %v708, %v1028
      %v1030 = vpop.f32.mrb[0].mxu0
      %1031 = vdwg.mxu0
      %vm1032 = vcmask 31744
      %1033 = vst.msk [vmem:[%s226] sm:$0xff] %vm1032, %v874
      %1034 = vst.msk [vmem:[%s226 + $0x8] sm:$0xff] %vm1032, %v879
      %1035 = vst.msk [vmem:[%s226 + $0x10] sm:$0xff] %vm1032, %v884
      %1036 = vst.msk [vmem:[%s226 + $0x18] sm:$0xff] %vm1032, %v889
      %1037 = vst.msk [vmem:[%s226 + $0x20] sm:$0xff] %vm1032, %v894
      %1038 = vst.msk [vmem:[%s226 + $0x28] sm:$0xff] %vm1032, %v899
      %1039 = vst.msk [vmem:[%s226 + $0x30] sm:$0xff] %vm1032, %v904
      %1040 = vst.msk [vmem:[%s226 + $0x38] sm:$0xff] %vm1032, %v909
      %1041 = vst.msk [vmem:[%s226 + $0x40] sm:$0xff] %vm1032, %v914
      %1042 = vst.msk [vmem:[%s226 + $0x48] sm:$0xff] %vm1032, %v919
      %1043 = vst.msk [vmem:[%s226 + $0x50] sm:$0xff] %vm1032, %v924
      %1044 = vst.msk [vmem:[%s226 + $0x58] sm:$0xff] %vm1032, %v929
      %1045 = vst.msk [vmem:[%s226 + $0x60] sm:$0xff] %vm1032, %v934
      %1046 = vst.msk [vmem:[%s226 + $0x68] sm:$0xff] %vm1032, %v939
      %1047 = vst.msk [vmem:[%s226 + $0x70] sm:$0xff] %vm1032, %v944
      %1048 = vst.msk [vmem:[%s226 + $0x78] sm:$0xff] %vm1032, %v949
      %1049 = vst.msk [vmem:[%s226 + $0x80] sm:$0xff] %vm1032, %v954
      %1050 = vst.msk [vmem:[%s226 + $0x88] sm:$0xff] %vm1032, %v959
      %1051 = vst.msk [vmem:[%s226 + $0x90] sm:$0xff] %vm1032, %v964
      %1052 = vst.msk [vmem:[%s226 + $0x98] sm:$0xff] %vm1032, %v969
      %1053 = vst.msk [vmem:[%s226 + $0xa0] sm:$0xff] %vm1032, %v974
      %1054 = vst.msk [vmem:[%s226 + $0xa8] sm:$0xff] %vm1032, %v979
      %1055 = vst.msk [vmem:[%s226 + $0xb0] sm:$0xff] %vm1032, %v984
      %1056 = vst.msk [vmem:[%s226 + $0xb8] sm:$0xff] %vm1032, %v989
      %1057 = vst.msk [vmem:[%s226 + $0xc0] sm:$0xff] %vm1032, %v994
      %1058 = vst.msk [vmem:[%s226 + $0xc8] sm:$0xff] %vm1032, %v999
      %1059 = vst.msk [vmem:[%s226 + $0xd0] sm:$0xff] %vm1032, %v1004
      %1060 = vst.msk [vmem:[%s226 + $0xd8] sm:$0xff] %vm1032, %v1009
      %1061 = vst.msk [vmem:[%s226 + $0xe0] sm:$0xff] %vm1032, %v1014
      %1062 = vst.msk [vmem:[%s226 + $0xe8] sm:$0xff] %vm1032, %v1019
      %1063 = vst.msk [vmem:[%s226 + $0xf0] sm:$0xff] %vm1032, %v1024
      %1064 = vst.msk [vmem:[%s226 + $0xf8] sm:$0xff] %vm1032, %v1029
      %s1065 = smul.u32 32, %s16
      %p1066 = scmp.lt.s32.totalorder %s1065, 255
      %s1067 = scalar_select %p1066, %s1065, 255
      %s1068 = smul.addr %s1067, 8
      %s1069 = scalar_lea.vmem %s5, %s1068
      // Predicated region
      $region41: #{_ffnn_pallas.1} parent=39 // pred_check
        %p1070 = pneg %p144
      $region42: #{_ffnn_pallas.1} parent=39 // pred_check_branch
        %1072 = sbr.rel (%p1070) target = $region44
      $region43: #{_ffnn_pallas.1} parent=39 // pred_region
        %s1073 = smul.u32 32, %s16
      $region44: #{_ffnn_pallas.1} parent=39 // pred_fallthru
        _
    $region40: #{_ffnn_pallas.1} parent=5 // pred_fallthru
      _
    %p1074 = scmp.le.s32.totalorder 2, %s11
    // Predicated region
    $region45: #{_ffnn_pallas.1} parent=5 // pred_check
      %p1075 = pneg %p1074
    $region46: #{_ffnn_pallas.1} parent=5 // pred_check_branch
      %1077 = sbr.rel (%p1075) target = $region48
    $region47: #{_ffnn_pallas.1} parent=5 // pred_region
      %s1078 = ssub.s32 %s11, 2
      // Predicated region
      $region49: #{_ffnn_pallas.1} parent=47 // pred_check
        %p1079 = pneg %p150
      $region50: #{_ffnn_pallas.1} parent=47 // pred_check_branch
        %1081 = sbr.rel (%p1079) target = $region52
      $region51: #{_ffnn_pallas.1} parent=47 // pred_region
        %s1082 = smul.u32 32, %s17
        %p1083 = scmp.lt.s32.totalorder %s1082, 255
        %s1084 = scalar_select %p1083, %s1082, 255
        %s1085 = smul.addr %s1084, 8
        %s1086 = scalar_lea.vmem %s5, %s1085
      $region52: #{_ffnn_pallas.1} parent=47 // pred_fallthru
        _
    $region48: #{_ffnn_pallas.1} parent=5 // pred_fallthru
      _
  $region6: #{_ffnn_pallas.1} parent=0 // loop_footer
    %s15 = sadd.s32 1, %s11
  $region7: #{_ffnn_pallas.1} parent=0 // loop_footer_branch
    %10 = sbr.rel target = $region3
  $region8: #{_ffnn_pallas.1} parent=0 // loop_exit
    _

</llo_original>
